<compile_context>
chip_gen: v6e
topology: v6e:2x2x1
jax: 0.10.0
libtpu: 0.0.40
codegen_flags: <defaults>
</compile_context>

<pallas_src>
import functools

import jax
import jax.numpy as jnp
from jax import lax
from jax.experimental import pallas as pl
from jax.experimental.pallas import tpu as pltpu


def _round_up(x, m):
    return (x + m - 1) // m * m


def _style_loss_kernel(gram_s_ref, gen_ref, loss_ref, gram_acc_ref,
                       *, gram_scale, cast_bf16):
    k = pl.program_id(1)

    @pl.when(k == 0)
    def _():
        gram_acc_ref[...] = jnp.zeros_like(gram_acc_ref)

    t = gen_ref[0]                       # (nc_pad, TK)
    if cast_bf16:                        # optional (slightly changes numerics)
        t = t.astype(jnp.bfloat16)
    # t @ t.T expressed as a contraction on the shared last (lane) axis:
    # feeds the MXU directly, f32 accumulation.
    gram_acc_ref[...] += lax.dot_general(
        t, t,
        dimension_numbers=(((1,), (1,)), ((), ())),
        preferred_element_type=jnp.float32)

    # Epilogue: only at the last K step read gram_S, form the diff and reduce.
    @pl.when(k == pl.num_programs(1) - 1)
    def _():
        gram = gram_acc_ref[...] * gram_scale
        diff = gram_s_ref[0].astype(jnp.float32) - gram
        loss_ref[...] = jnp.sum(diff * diff).reshape(1, 1, 1)


def gram_calc_ref(t):
    """Pure-JAX reference of the PyTorch gram_calc."""
    bs, nc, h, w = t.shape
    t_ = t.reshape(bs, nc, h * w)
    return jnp.einsum("bik,bjk->bij", t_, t_) / (bs * nc * h * w)


@functools.partial(jax.jit, static_argnames=("tk_max", "cast_bf16"))
def style_loss_pallas(gram_S, generated, *, tk_max=4096, cast_bf16=False):
    """Returns (generated, loss). The bmm + MSE hot path runs in Pallas."""
    bs, nc, h, w = generated.shape
    hw = h * w

    # --- padding / tiling choices -------------------------------------------
    nc_pad = max(8, _round_up(nc, 8))            # sublane multiple
    hw128 = _round_up(hw, 128)                   # lane multiple
    # Bound TK so the double-buffered gen tile stays ~<= 12 MiB (safe for
    # v5e 16 MiB / v6e-v7x 32 MiB scoped VMEM defaults, with headroom for the
    # gram_S buffers + scratch accumulator).
    tk_budget = max(128, ((12 << 20) // (nc_pad * 4 * 2)) // 128 * 128)
    tk = int(min(tk_max, tk_budget, hw128))
    hw_pad = _round_up(hw, tk)
    k_steps = hw_pad // tk

    # --- reshape / zero-pad (zeros contribute 0 to t @ t^T and to the diff) --
    gen_flat = generated.reshape(bs, nc, hw)
    if nc_pad != nc or hw_pad != hw:
        gen_flat = jnp.pad(gen_flat,
                           ((0, 0), (0, nc_pad - nc), (0, hw_pad - hw)))
    gram_S_p = gram_S.astype(jnp.float32)
    if nc_pad != nc:
        gram_S_p = jnp.pad(gram_S_p,
                           ((0, 0), (0, nc_pad - nc), (0, nc_pad - nc)))

    gram_scale = 1.0 / (bs * nc * h * w)         # divisor inside gram_calc
    mse_denom = float(bs * nc * nc)              # mean over gram elements

    # --- explicit VMEM budget -------------------------------------------------
    vmem_bytes = (2 * nc_pad * tk * 4            # gen double-buffer
                  + 2 * nc_pad * nc_pad * 4      # gram_S double-buffer
                  + nc_pad * nc_pad * 4          # gram scratch
                  + (1 << 16))                   # loss blocks + slack
    vmem_bytes = int(min(max(vmem_bytes * 2, 4 << 20), 32 << 20))

    kernel = functools.partial(_style_loss_kernel,
                               gram_scale=gram_scale,
                               cast_bf16=cast_bf16)

    partial_loss = pl.pallas_call(
        kernel,
        out_shape=jax.ShapeDtypeStruct((bs, 1, 1), jnp.float32),
        grid_spec=pltpu.PrefetchScalarGridSpec(
            num_scalar_prefetch=0,
            grid=(bs, k_steps),
            in_specs=[
                # gram_S: same block for all k -> DMA'd once per batch elem.
                pl.BlockSpec((1, nc_pad, nc_pad), lambda b, k: (b, 0, 0)),
                # generated: K-tiled along the contraction axis.
                pl.BlockSpec((1, nc_pad, tk), lambda b, k: (b, 0, k)),
            ],
            # per-batch partial loss -> batch axis can be 'parallel' (no race).
            out_specs=pl.BlockSpec((1, 1, 1), lambda b, k: (b, 0, 0)),
            scratch_shapes=[pltpu.VMEM((nc_pad, nc_pad), jnp.float32)],
        ),
        compiler_params=pltpu.CompilerParams(
            dimension_semantics=("parallel", "arbitrary"),
            vmem_limit_bytes=vmem_bytes),
    )(gram_S_p, gen_flat)

    loss = jnp.sum(partial_loss) / mse_denom
    # forward() returns Generated unchanged; loss mirrors self.loss
    return generated, loss


class StyleLossPallas:
    """JAX/Pallas analogue of the PyTorch StyleLoss module."""

    def __init__(self, style):
        self.style = style
        # gram of the fixed style image (precomputed once, like in __init__)
        self.gram_S = gram_calc_ref(style).astype(jnp.float32)
        self.loss = None

    def __call__(self, generated):
        out, loss = style_loss_pallas(self.gram_S, generated)
        self.loss = loss
        return out


if __name__ == "__main__":
    key = jax.random.PRNGKey(0)
    k_style, k_gen = jax.random.split(key)

    bs, nc, h, w = 2, 4, 16, 16
    style = jax.random.normal(k_style, (bs, nc, h, w), dtype=jnp.float32)
    generated = jax.random.normal(k_gen, (bs, nc, h, w), dtype=jnp.float32)

    module = StyleLossPallas(style)
    out = module(generated)
    out = jax.block_until_ready(out)
    loss = jax.block_until_ready(module.loss)

    # sanity-check against a pure-JAX reference (same semantics as PyTorch)
    gram_G_ref = gram_calc_ref(generated)
    loss_ref = jnp.mean((module.gram_S - gram_G_ref) ** 2)
    assert jnp.allclose(out, generated), "forward must return Generated unchanged"
    assert jnp.allclose(loss, loss_ref, rtol=1e-4, atol=1e-6), (loss, loss_ref)

    print("KERNEL_OK")
</pallas_src>

<mosaic_0001>
module attributes {stable_mosaic.version = 11 : i64} {
  func.func @_style_loss_kernel(%arg0: i32, %arg1: i32, %arg2: memref<1x8x8xf32, #tpu.memory_space<vmem>>, %arg3: memref<1x8x256xf32, #tpu.memory_space<vmem>>, %arg4: memref<1x1x1xf32, #tpu.memory_space<vmem>>, %arg5: memref<8x8xf32, #tpu.memory_space<vmem>>) attributes {dimension_semantics = [#tpu.dimension_semantics<parallel>, #tpu.dimension_semantics<arbitrary>], iteration_bounds = array<i64: 2, 1>, scalar_prefetch = 0 : i64, scratch_operands = 1 : i64, tpu.core_type = #tpu.core_type<tc>, window_params = [{transform_indices = @transform_0, window_bounds = array<i64: 1, 8, 8>}, {transform_indices = @transform_1, window_bounds = array<i64: 1, 8, 256>}, {transform_indices = @transform_2, window_bounds = array<i64: 1, 1, 1>}]} {
    %c0_i32 = arith.constant 0 : i32
    %0 = arith.cmpi eq, %arg1, %c0_i32 : i32
    %1 = arith.extui %0 : i1 to i32
    %c0_i32_0 = arith.constant 0 : i32
    %2 = arith.cmpi ne, %1, %c0_i32_0 : i32
    scf.if %2 {
      %cst_9 = arith.constant 0.000000e+00 : f32
      %12 = vector.broadcast %cst_9 : f32 to vector<8x8xf32>
      %c0_10 = arith.constant 0 : index
      %c0_11 = arith.constant 0 : index
      %13 = vector.load %arg5[%c0_10, %c0_11] : memref<8x8xf32, #tpu.memory_space<vmem>>, vector<8x8xf32>
      tpu.vector_store %arg5[%c0_10, %c0_11], %12 {strides = array<i32>} : memref<8x8xf32, #tpu.memory_space<vmem>>, vector<8x8xf32>,
    } else {
    }
    %c0 = arith.constant 0 : index
    %c0_1 = arith.constant 0 : index
    %c0_2 = arith.constant 0 : index
    %3 = vector.load %arg3[%c0, %c0_1, %c0_2] : memref<1x8x256xf32, #tpu.memory_space<vmem>>, vector<1x8x256xf32>
    %4 = vector.shape_cast %3 : vector<1x8x256xf32> to vector<8x256xf32>
    %c0_3 = arith.constant 0 : index
    %c0_4 = arith.constant 0 : index
    %5 = vector.load %arg5[%c0_3, %c0_4] : memref<8x8xf32, #tpu.memory_space<vmem>>, vector<8x8xf32>
    %cst = arith.constant dense<0.000000e+00> : vector<8x8xf32>
    %6 = tpu.matmul %4, %4, %cst {dimension_numbers = #tpu.dot_dimension_numbers<[1], [1], [0], [0], [0, 0, 1, 0], [], []>} : vector<8x256xf32>, vector<8x256xf32>, vector<8x8xf32> -> vector<8x8xf32>
    %7 = arith.addf %5, %6 : vector<8x8xf32>
    %c0_5 = arith.constant 0 : index
    %c0_6 = arith.constant 0 : index
    %8 = vector.load %arg5[%c0_5, %c0_6] : memref<8x8xf32, #tpu.memory_space<vmem>>, vector<8x8xf32>
    tpu.vector_store %arg5[%c0_5, %c0_6], %7 {strides = array<i32>} : memref<8x8xf32, #tpu.memory_space<vmem>>, vector<8x8xf32>,
    %c0_i32_7 = arith.constant 0 : i32
    %9 = arith.cmpi eq, %arg1, %c0_i32_7 : i32
    %10 = arith.extui %9 : i1 to i32
    %c0_i32_8 = arith.constant 0 : i32
    %11 = arith.cmpi ne, %10, %c0_i32_8 : i32
    scf.if %11 {
      %c0_9 = arith.constant 0 : index
      %c0_10 = arith.constant 0 : index
      %12 = vector.load %arg5[%c0_9, %c0_10] : memref<8x8xf32, #tpu.memory_space<vmem>>, vector<8x8xf32>
      %cst_11 = arith.constant 4.8828125E-4 : f32
      %13 = vector.broadcast %cst_11 : f32 to vector<8x8xf32>
      %14 = arith.mulf %12, %13 : vector<8x8xf32>
      %c0_12 = arith.constant 0 : index
      %c0_13 = arith.constant 0 : index
      %c0_14 = arith.constant 0 : index
      %15 = vector.load %arg2[%c0_12, %c0_13, %c0_14] : memref<1x8x8xf32, #tpu.memory_space<vmem>>, vector<1x8x8xf32>
      %16 = vector.shape_cast %15 : vector<1x8x8xf32> to vector<8x8xf32>
      %17 = arith.subf %16, %14 : vector<8x8xf32>
      %18 = arith.mulf %17, %17 : vector<8x8xf32>
      %19 = vector.shape_cast %18 : vector<8x8xf32> to vector<1x8x8xf32>
      %cst_15 = arith.constant dense<0.000000e+00> : vector<1xf32>
      %20 = vector.multi_reduction <add>, %19, %cst_15 [1, 2] : vector<1x8x8xf32> to vector<1xf32>
      %21 = vector.shape_cast %20 : vector<1xf32> to vector<1x1x1xf32>
      %22 = vector.extract %21[0, 0, 0] : f32 from vector<1x1x1xf32>
      %23 = vector.broadcast %22 : f32 to vector<1x1x1xf32>
      %c0_16 = arith.constant 0 : index
      %c0_17 = arith.constant 0 : index
      %c0_18 = arith.constant 0 : index
      %24 = vector.load %arg4[%c0_16, %c0_17, %c0_18] : memref<1x1x1xf32, #tpu.memory_space<vmem>>, vector<1x1x1xf32>
      tpu.vector_store %arg4[%c0_16, %c0_17, %c0_18], %23 {strides = array<i32>} : memref<1x1x1xf32, #tpu.memory_space<vmem>>, vector<1x1x1xf32>,
    } else {
    }
    return
  }
  func.func @transform_0(%arg0: i32, %arg1: i32) -> (i32, i32, i32) {
    %c0_i32 = arith.constant 0 : i32
    %c0_i32_0 = arith.constant 0 : i32
    %c0_i32_1 = arith.constant 0 : i32
    return %arg0, %c0_i32, %c0_i32_0 : i32, i32, i32
  }
  func.func @transform_1(%arg0: i32, %arg1: i32) -> (i32, i32, i32) {
    %c0_i32 = arith.constant 0 : i32
    %c0_i32_0 = arith.constant 0 : i32
    return %arg0, %c0_i32, %arg1 : i32, i32, i32
  }
  func.func @transform_2(%arg0: i32, %arg1: i32) -> (i32, i32, i32) {
    %c0_i32 = arith.constant 0 : i32
    %c0_i32_0 = arith.constant 0 : i32
    %c0_i32_1 = arith.constant 0 : i32
    return %arg0, %c0_i32, %c0_i32_0 : i32, i32, i32
  }
}

</mosaic_0001>

<llo_original>
// kernel: style_loss_pallas.1
$region0: #{style_loss_pallas.1}
  #allocation0 [shape = 'u32[]', space=smem, size = 0x4, offset = 0x4, fixed_abs, tag = 'smem constant byte address 0x4 - core index']
  #allocation1 [shape = 'u32[144,128]{1,0:T(1,128)}', space=vmem, size = 0x12000, scoped, tag = 'internal scratch']
  #allocation2 [shape = 'f32[8,8]{1,0:T(8,128)}', space=vmem, size = 0x1000, scoped, tag = 'scratch operand']
  %s0 = inlined_call_operand.vmem [shape: f32[2,8,8], index: 0, kind: input, shape index: {}]
  %s1 = inlined_call_operand.vmem [shape: f32[2,8,256], index: 1, kind: input, shape index: {}]
  %s2 = inlined_call_operand.vmem [shape: f32[2,1,1], index: 2, kind: output, shape index: {}]
  %s3 = sld [smem:[#allocation0]]
  $region49: #{style_loss_pallas.1} parent=0
    _
  %s5 = ssub.s32 1, %s3
  %s6 = scalar_select 0, %s5, %s3
  loop: start=0, step=1, limit=4
  $region2: #{style_loss_pallas.1} parent=0 // loop_pre_header
    _
  $region3: #{style_loss_pallas.1} parent=0 // loop_header
    %s8 = sphi 0, %s12
    %p9 = scmp.ge.s32.totalorder %s8, 4
    %s15 = sphi 0, %s27
    %s16 = sphi 0, %s23
    %s17 = sphi 0, %s15
    %s18 = sphi 0, %s16
    %s19 = sphi 0, %s17
    %s20 = sphi 0, %s18
    %s30 = sphi 0, %s32
    %s33 = sphi 0, %s30
    %s34 = sphi 0, %s33
    %s50 = sphi 0, %s34
    %s58 = sphi 0, %s60
    %s61 = sphi 0, %s58
    %s62 = sphi 0, %s61
    %s78 = sphi 0, %s62
    %s84 = sphi 0, %s86
    %s87 = sphi 0, %s84
    %s88 = sphi 0, %s87
    %s104 = sphi 0, %s88
  $region4: #{style_loss_pallas.1} parent=0 // loop_header_branch
    %11 = sbr.rel (%p9) target = $region8
  $region5: #{style_loss_pallas.1} parent=0 // loop_body
    %s13 = ssub.s32 %s8, 1
    %s14 = ssub.s32 %s8, 2
    %s21 = sadd.s32 1, %s16
    %p22 = scmp.ge.s32.totalorder %s21, 1
    %s23 = scalar_select %p22, 0, %s21
    %s24 = sadd.s32 1, %s15
    %s25 = scalar_select %p22, %s24, %s15
    %p26 = scmp.ge.s32.totalorder %s25, 2
    %s27 = scalar_select %p26, 0, %s25
    %s28 = ssub.s32 %s15, %s27
    %p29 = scmp.eq.s32.totalorder %s28, 0
    %s31 = sadd.s32 %s30, 1
    %s32 = scalar_select %p29, %s30, %s31
    %p35 = pneg %p29
    %p36 = scmp.eq.s32.totalorder %s8, 1
    %p37 = por %p35, %p36
    %p38 = scmp.ne.s32.totalorder %s30, %s33
    %p39 = scmp.eq.s32.totalorder %s8, 0
    %p40 = por %p38, %p39
    %p41 = scmp.ne.s32.totalorder %s30, %s33
    %p42 = scmp.eq.s32.totalorder %s13, 1
    %p43 = por %p41, %p42
    %p44 = scmp.ne.s32.totalorder %s33, %s34
    %p45 = scmp.eq.s32.totalorder %s13, 0
    %p46 = por %p44, %p45
    %p47 = scmp.ne.s32.totalorder %s33, %s34
    %p48 = scmp.eq.s32.totalorder %s14, 1
    %p49 = por %p47, %p48
    %p51 = scmp.ne.s32.totalorder %s34, %s50
    %p52 = scmp.eq.s32.totalorder %s14, 0
    %p53 = por %p51, %p52
    %s54 = ssub.s32 %s15, %s27
    %s55 = ssub.s32 %s16, %s23
    %s56 = sor.u32 %s54, %s55
    %p57 = scmp.eq.s32.totalorder %s56, 0
    %s59 = sadd.s32 %s58, 1
    %s60 = scalar_select %p57, %s58, %s59
    %p63 = pneg %p57
    %p64 = scmp.eq.s32.totalorder %s8, 1
    %p65 = por %p63, %p64
    %p66 = scmp.ne.s32.totalorder %s58, %s61
    %p67 = scmp.eq.s32.totalorder %s8, 0
    %p68 = por %p66, %p67
    %p69 = scmp.ne.s32.totalorder %s58, %s61
    %p70 = scmp.eq.s32.totalorder %s13, 1
    %p71 = por %p69, %p70
    %p72 = scmp.ne.s32.totalorder %s61, %s62
    %p73 = scmp.eq.s32.totalorder %s13, 0
    %p74 = por %p72, %p73
    %p75 = scmp.ne.s32.totalorder %s61, %s62
    %p76 = scmp.eq.s32.totalorder %s14, 1
    %p77 = por %p75, %p76
    %p79 = scmp.ne.s32.totalorder %s62, %s78
    %p80 = scmp.eq.s32.totalorder %s14, 0
    %p81 = por %p79, %p80
    %s82 = ssub.s32 %s15, %s27
    %p83 = scmp.eq.s32.totalorder %s82, 0
    %s85 = sadd.s32 %s84, 1
    %s86 = scalar_select %p83, %s84, %s85
    %p89 = pneg %p83
    %p90 = scmp.eq.s32.totalorder %s8, 1
    %p91 = por %p89, %p90
    %p92 = scmp.ne.s32.totalorder %s84, %s87
    %p93 = scmp.eq.s32.totalorder %s8, 0
    %p94 = por %p92, %p93
    %p95 = scmp.ne.s32.totalorder %s84, %s87
    %p96 = scmp.eq.s32.totalorder %s13, 1
    %p97 = por %p95, %p96
    %p98 = scmp.ne.s32.totalorder %s87, %s88
    %p99 = scmp.eq.s32.totalorder %s13, 0
    %p100 = por %p98, %p99
    %p101 = scmp.ne.s32.totalorder %s87, %s88
    %p102 = scmp.eq.s32.totalorder %s14, 1
    %p103 = por %p101, %p102
    %p105 = scmp.ne.s32.totalorder %s88, %s104
    %p106 = scmp.eq.s32.totalorder %s14, 0
    %p107 = por %p105, %p106
    %p108 = scmp.le.s32.totalorder 1, %s8
    %p109 = scmp.lt.s32.totalorder %s8, 3
    %p110 = pnand %p108, %p109
    %p111 = pneg %p110
    // Predicated region
    $region9: #{style_loss_pallas.1} parent=5 // pred_check
      _
    $region10: #{style_loss_pallas.1} parent=5 // pred_check_branch
      %113 = sbr.rel (%p110) target = $region12
    $region11: #{style_loss_pallas.1} parent=5 // pred_region
      %s114 = ssub.s32 %s8, 1
    $region12: #{style_loss_pallas.1} parent=5 // pred_fallthru
      _
    %p115 = scmp.lt.s32.totalorder %s8, 2
    // Predicated region
    $region13: #{style_loss_pallas.1} parent=5 // pred_check
      %p116 = pneg %p115
    $region14: #{style_loss_pallas.1} parent=5 // pred_check_branch
      %118 = sbr.rel (%p116) target = $region16
    $region15: #{style_loss_pallas.1} parent=5 // pred_region
      // Predicated region
      $region17: #{style_loss_pallas.1} parent=15 // pred_check
        %p119 = pneg %p40
      $region18: #{style_loss_pallas.1} parent=15 // pred_check_branch
        %121 = sbr.rel (%p119) target = $region20
      $region19: #{style_loss_pallas.1} parent=15 // pred_region
        %p122 = scmp.lt.s32.totalorder %s15, 1
        %s123 = scalar_select %p122, %s15, 1
        %s124 = smul.addr %s123, 8
        %s125 = scalar_lea.vmem %s0, %s124
      $region20: #{style_loss_pallas.1} parent=15 // pred_fallthru
        _
      // Predicated region
      $region21: #{style_loss_pallas.1} parent=15 // pred_check
        %p126 = pneg %p68
      $region22: #{style_loss_pallas.1} parent=15 // pred_check_branch
        %128 = sbr.rel (%p126) target = $region24
      $region23: #{style_loss_pallas.1} parent=15 // pred_region
        %s129 = smul.u32 2, %s16
        %p130 = scmp.lt.s32.totalorder %s15, 1
        %s131 = scalar_select %p130, %s15, 1
        %p132 = scmp.lt.s32.totalorder %s129, 1
        %s133 = scalar_select %p132, %s129, 1
        %s134 = smul.addr %s131, 2
        %s135 = sadd.s32 %s133, %s134
        %s136 = smul.addr %s135, 8
        %s137 = scalar_lea.vmem %s1, %s136
        %s138 = smul.u32 2, %s16
      $region24: #{style_loss_pallas.1} parent=15 // pred_fallthru
        _
    $region16: #{style_loss_pallas.1} parent=5 // pred_fallthru
      _
    %p139 = scmp.le.s32.totalorder 1, %s8
    %p140 = scmp.lt.s32.totalorder %s8, 3
    %p141 = pnand %p139, %p140
    %p142 = pneg %p141
    // Predicated region
    $region25: #{style_loss_pallas.1} parent=5 // pred_check
      _
    $region26: #{style_loss_pallas.1} parent=5 // pred_check_branch
      %144 = sbr.rel (%p141) target = $region28
    $region27: #{style_loss_pallas.1} parent=5 // pred_region
      %s145 = ssub.s32 %s8, 1
      %p146 = scmp.lt.s32.totalorder %s17, 1
      %s147 = scalar_select %p146, %s17, 1
      %s148 = smul.addr %s147, 8
      %s149 = scalar_lea.vmem %s0, %s148
      %p150 = pneg %p46
      %p151 = pneg %p43
      %s152 = smul.u32 2, %s18
      %p153 = scmp.lt.s32.totalorder %s17, 1
      %s154 = scalar_select %p153, %s17, 1
      %p155 = scmp.lt.s32.totalorder %s152, 1
      %s156 = scalar_select %p155, %s152, 1
      %s157 = smul.addr %s154, 2
      %s158 = sadd.s32 %s156, %s157
      %s159 = smul.addr %s158, 8
      %s160 = scalar_lea.vmem %s1, %s159
      %p161 = pneg %p74
      %p162 = pneg %p71
      %p163 = pneg %p100
      %p164 = pneg %p97
      %p165 = scmp.lt.s32.totalorder %s17, 1
      %s166 = scalar_select %p165, %s17, 1
      %s167 = scalar_lea.vmem %s2, %s166
      %p168 = scmp.lt.s32.totalorder %s17, 1
      %s169 = scalar_select %p168, %s17, 1
      %s170 = smul.addr %s169, 8
      %s171 = scalar_lea.vmem %s0, %s170
      %s172 = smul.u32 2, %s18
      %p173 = scmp.lt.s32.totalorder %s17, 1
      %s174 = scalar_select %p173, %s17, 1
      %p175 = scmp.lt.s32.totalorder %s172, 1
      %s176 = scalar_select %p175, %s172, 1
      %s177 = smul.addr %s174, 2
      %s178 = sadd.s32 %s176, %s177
      %s179 = smul.addr %s178, 8
      %s180 = scalar_lea.vmem %s1, %s179
      %s181 = smul.u32 2, %s18
      %p182 = scmp.lt.s32.totalorder %s17, 1
      %s183 = scalar_select %p182, %s17, 1
      %s184 = scalar_lea.vmem %s2, %s183
      %p185 = scmp.eq.s32.totalorder %s18, 0
      // Predicated region
      $region29: #{style_loss_pallas.1} parent=27 // pred_check
        %p186 = pneg %p185
      $region30: #{style_loss_pallas.1} parent=27 // pred_check_branch
        %188 = sbr.rel (%p186) target = $region32
      $region31: #{style_loss_pallas.1} parent=27 // pred_region
        %vm189 = vcmask 64512
        %190 = vst.msk [vmem:[#allocation2] sm:$0xff] %vm189, 0.0
      $region32: #{style_loss_pallas.1} parent=27 // pred_fallthru
        _
      %v191 = vld [vmem:[%s180] sm:$0xff]
      %v192 = vld [vmem:[%s180 + $0x8] sm:$0xff]
      %v193 = vld [vmem:[#allocation2] sm:$0xff]
      %194 = vmatprep.subr.mxu0 0.0
      %195 = vmatpush1.xpose.msra.mxu0 0.0
      %196 = vmatprep.subr.mxu0 0.0
      %197 = vmatpush1.xpose.msra.mxu0 0.0
      %198 = vmatprep.subr.mxu0 0.0
      %199 = vmatpush1.xpose.msra.mxu0 0.0
      %200 = vmatprep.subr.mxu0 0.0
      %201 = vmatpush1.xpose.msra.mxu0 0.0
      %202 = vmatprep.subr.mxu0 0.0
      %203 = vmatpush1.xpose.msra.mxu0 0.0
      %204 = vmatprep.subr.mxu0 0.0
      %205 = vmatpush1.xpose.msra.mxu0 0.0
      %206 = vmatprep.subr.mxu0 0.0
      %207 = vmatpush1.xpose.msra.mxu0 0.0
      %208 = vmatprep.subr.mxu0 0.0
      %209 = vmatpush1.xpose.msra.mxu0 0.0
      %210 = vmatprep.subr.mxu0 0.0
      %211 = vmatpush1.xpose.msra.mxu0 0.0
      %212 = vmatprep.subr.mxu0 0.0
      %213 = vmatpush1.xpose.msra.mxu0 0.0
      %214 = vmatprep.subr.mxu0 0.0
      %215 = vmatpush1.xpose.msra.mxu0 0.0
      %216 = vmatprep.subr.mxu0 0.0
      %217 = vmatpush1.xpose.msra.mxu0 0.0
      %218 = vmatprep.subr.mxu0 0.0
      %219 = vmatpush1.xpose.msra.mxu0 0.0
      %220 = vmatprep.subr.mxu0 0.0
      %221 = vmatpush1.xpose.msra.mxu0 0.0
      %222 = vmatprep.subr.mxu0 0.0
      %223 = vmatpush1.xpose.msra.mxu0 0.0
      %224 = vmatprep.subr.mxu0 %v192
      %225 = vmatpush1.xpose.msra.mxu0 %v191
      %226 = vmatprep.subr.mxu0 0.0
      %227 = vmatpush2.xpose.msra.mxu0 0.0
      %228 = vmatprep.subr.mxu0 0.0
      %229 = vmatpush2.xpose.msra.mxu0 0.0
      %230 = vmatprep.subr.mxu0 0.0
      %231 = vmatpush2.xpose.msra.mxu0 0.0
      %232 = vmatprep.subr.mxu0 0.0
      %233 = vmatpush2.xpose.msra.mxu0 0.0
      %234 = vmatprep.subr.mxu0 0.0
      %235 = vmatpush2.xpose.msra.mxu0 0.0
      %236 = vmatprep.subr.mxu0 0.0
      %237 = vmatpush2.xpose.msra.mxu0 0.0
      %238 = vmatprep.subr.mxu0 0.0
      %239 = vmatpush2.xpose.msra.mxu0 0.0
      %240 = vmatprep.subr.mxu0 0.0
      %241 = vmatpush2.xpose.msra.mxu0 0.0
      %242 = vmatprep.subr.mxu0 0.0
      %243 = vmatpush2.xpose.msra.mxu0 0.0
      %244 = vmatprep.subr.mxu0 0.0
      %245 = vmatpush2.xpose.msra.mxu0 0.0
      %246 = vmatprep.subr.mxu0 0.0
      %247 = vmatpush2.xpose.msra.mxu0 0.0
      %248 = vmatprep.subr.mxu0 0.0
      %249 = vmatpush2.xpose.msra.mxu0 0.0
      %250 = vmatprep.subr.mxu0 0.0
      %251 = vmatpush2.xpose.msra.mxu0 0.0
      %252 = vmatprep.subr.mxu0 0.0
      %253 = vmatpush2.xpose.msra.mxu0 0.0
      %254 = vmatprep.subr.mxu0 0.0
      %255 = vmatpush2.xpose.msra.mxu0 0.0
      %256 = vmatprep.subr.mxu0 0.0
      %257 = vmatpush2.xpose.msra.mxu0 0.0
      %258 = vmatprep.mubr.f32.mxu0 %v192
      %259 = vmatmul.mubr.f32.gmra.mxu0 %v191
      %v260 = vpop.f32.mrf.mxu0
      %v261 = vadd.f32 0.0, %v260
      %v262 = vpop.f32.mrf.mxu0
      %263 = vdwg.mxu0
      %v264 = vadd.f32 %v193, %v261
      %vm265 = vcmask 64512
      %266 = vst.msk [vmem:[#allocation2] sm:$0xff] %vm265, %v264
      // Predicated region
      $region33: #{style_loss_pallas.1} parent=27 // pred_check
        %p267 = pneg %p185
      $region34: #{style_loss_pallas.1} parent=27 // pred_check_branch
        %269 = sbr.rel (%p267) target = $region36
      $region35: #{style_loss_pallas.1} parent=27 // pred_region
        %v270 = vld [vmem:[#allocation2] sm:$0xff]
        %v271 = vmul.f32 %v270, 0.00048828125
        %v272 = vld [vmem:[%s171] sm:$0xff]
        %v273 = vsub.f32 %v272, %v271
        %v274 = vmul.f32 %v273, %v273
        %v275 = vsel %vm265, %v274, 0.0
        %276 = vadd.xlane.f32.xlu0 %v275
        %v277 = vpop.xlane.xlu0 %276
        %v278 = vrot.slane %v277, 4
        %v279 = vadd.f32 %v277, %v278
        %v280 = vrot.slane %v279, 2
        %v281 = vadd.f32 %v279, %v280
        %v282 = vrot.slane %v281, 1
        %v283 = vadd.f32 %v281, %v282
        %s284 = vtos %v283
        %v285 = vstv %s284
        %vm286 = vcmask 0
        %287 = vst.msk [vmem:[%s184] sm:$0x1] %vm286, %v285
      $region36: #{style_loss_pallas.1} parent=27 // pred_fallthru
        _
      %p288 = scmp.lt.s32.totalorder %s17, 1
      %s289 = scalar_select %p288, %s17, 1
      %s290 = scalar_lea.vmem %s2, %s289
      // Predicated region
      $region37: #{style_loss_pallas.1} parent=27 // pred_check
        %p291 = pneg %p97
      $region38: #{style_loss_pallas.1} parent=27 // pred_check_branch
        %293 = sbr.rel (%p291) target = $region40
      $region39: #{style_loss_pallas.1} parent=27 // pred_region
        _
      $region40: #{style_loss_pallas.1} parent=27 // pred_fallthru
        _
    $region28: #{style_loss_pallas.1} parent=5 // pred_fallthru
      _
    %p294 = scmp.le.s32.totalorder 2, %s8
    // Predicated region
    $region41: #{style_loss_pallas.1} parent=5 // pred_check
      %p295 = pneg %p294
    $region42: #{style_loss_pallas.1} parent=5 // pred_check_branch
      %297 = sbr.rel (%p295) target = $region44
    $region43: #{style_loss_pallas.1} parent=5 // pred_region
      %s298 = ssub.s32 %s8, 2
      // Predicated region
      $region45: #{style_loss_pallas.1} parent=43 // pred_check
        %p299 = pneg %p103
      $region46: #{style_loss_pallas.1} parent=43 // pred_check_branch
        %301 = sbr.rel (%p299) target = $region48
      $region47: #{style_loss_pallas.1} parent=43 // pred_region
        %p302 = scmp.lt.s32.totalorder %s19, 1
        %s303 = scalar_select %p302, %s19, 1
        %s304 = scalar_lea.vmem %s2, %s303
      $region48: #{style_loss_pallas.1} parent=43 // pred_fallthru
        _
    $region44: #{style_loss_pallas.1} parent=5 // pred_fallthru
      _
  $region6: #{style_loss_pallas.1} parent=0 // loop_footer
    %s12 = sadd.s32 1, %s8
  $region7: #{style_loss_pallas.1} parent=0 // loop_footer_branch
    %7 = sbr.rel target = $region3
  $region8: #{style_loss_pallas.1} parent=0 // loop_exit
    _

</llo_original>
